<compile_context>
chip_gen: v7x
topology: tpu7x:2x2x1
jax: 0.10.0
libtpu: 0.0.40
codegen_flags: <defaults>
</compile_context>

<pallas_src>
from typing import NamedTuple

import jax
import jax.numpy as jnp
from jax.experimental import pallas as pl
from jax.experimental.pallas import tpu as pltpu


def _round_up(a, b):
    return (a + b - 1) // b * b


def _largest_divisor_tile(padded, unit, cap):
    """Largest multiple of `unit` that divides `padded` and is <= cap."""
    best = unit
    t = unit
    limit = min(cap, padded)
    while t <= limit:
        if padded % t == 0:
            best = t
        t += unit
    return best


# ---------------------------------------------------------------------------
# Kernels
# ---------------------------------------------------------------------------

def _linear_kernel_f32_out(x_ref, w_ref, b_ref, o_ref):
    """o = x @ W + b, accumulated directly into the resident f32 output tile.

    x_ref: (tm, tk)  activation tile (compute dtype)
    w_ref: (tk, tn)  weight tile, already in (E, C) layout
    b_ref: (1, tn)   f32 bias row
    o_ref: (tm, tn)  f32 output tile, resident across the k (reduction) axis
    """
    @pl.when(pl.program_id(2) == 0)
    def _():
        o_ref[...] = jnp.broadcast_to(b_ref[...], o_ref.shape)

    o_ref[...] += jnp.dot(x_ref[...], w_ref[...],
                          preferred_element_type=jnp.float32)


def _linear_kernel_acc(x_ref, w_ref, b_ref, o_ref, acc_ref):
    """Same contraction, with an explicit f32 accumulator for non-f32 outputs."""
    k = pl.program_id(2)

    @pl.when(k == 0)
    def _():
        acc_ref[...] = jnp.broadcast_to(b_ref[...], acc_ref.shape)

    acc_ref[...] += jnp.dot(x_ref[...], w_ref[...],
                            preferred_element_type=jnp.float32)

    @pl.when(k == pl.num_programs(2) - 1)
    def _():
        o_ref[...] = acc_ref[...].astype(o_ref.dtype)


# ---------------------------------------------------------------------------
# Parameter preparation (runs ONCE at init, like nn.Linear construction)
# ---------------------------------------------------------------------------

class ClassifierParams(NamedTuple):
    w_ec: jax.Array        # (Ep, Cp) weight, transposed + zero-padded, compute dtype
    b_row: jax.Array       # (1, Cp)  f32 bias, zero-padded
    num_classes: int
    embedding_size: int


def prepare_classifier_params(weight, bias, *, compute_dtype=jnp.float32):
    """One-time relayout of nn.Linear params for the Pallas kernel.

    weight: (C, E) PyTorch layout.  Stored transposed to (E, C) and zero-padded
    to (8, 128)-aligned extents so the forward kernel streams it as-is.
    bf16 `compute_dtype` halves streamed W bytes (recommended default on v5e).
    """
    C, E = weight.shape
    assert bias.shape == (C,)
    Ep = _round_up(E, 128)
    Cp = _round_up(C, 128)
    w_ec = (jnp.zeros((Ep, Cp), compute_dtype)
            .at[:E, :C].set(weight.T.astype(compute_dtype)))
    b_row = (jnp.zeros((1, Cp), jnp.float32)
             .at[0, :C].set(bias.astype(jnp.float32)))
    return ClassifierParams(w_ec, b_row, C, E)


# ---------------------------------------------------------------------------
# Forward
# ---------------------------------------------------------------------------

def classifier_forward(params, x, *, tm=None, tn=None, tk=None):
    """Equivalent of PyTorch nn.Linear forward: x @ W.T + b.

    x: (B, E).  Returns (B, num_classes) in x.dtype.
    """
    B, E = x.shape
    C = params.num_classes
    assert E == params.embedding_size
    Ep, Cp = params.w_ec.shape
    compute_dtype = params.w_ec.dtype
    out_dtype = x.dtype

    # --- tiling --------------------------------------------------------------
    sub = 16 if compute_dtype == jnp.bfloat16 else 8
    Bp = _round_up(B, sub)
    # Tiles must divide the (already 128-aligned) padded dims so no extra zero
    # rows/columns are streamed from HBM.  tm covers the whole (small) batch
    # when possible so the weight is read exactly once (gi == 1).
    tm = tm or _largest_divisor_tile(Bp, sub, 512)
    tn = tn or _largest_divisor_tile(Cp, 128, 1024)
    tk = tk or _largest_divisor_tile(Ep, 128, 2048)
    assert Bp % tm == 0 and Cp % tn == 0 and Ep % tk == 0
    grid = (Bp // tm, Cp // tn, Ep // tk)
    gi, gj, gk = grid

    # --- activations: pass through untouched when already aligned ------------
    if B == Bp and E == Ep and x.dtype == compute_dtype:
        xp = x
    else:
        xp = (jnp.zeros((Bp, Ep), compute_dtype)
              .at[:B, :E].set(x.astype(compute_dtype)))

    # --- kernel / scratch selection -------------------------------------------
    w_item = jnp.dtype(compute_dtype).itemsize
    out_item = jnp.dtype(out_dtype).itemsize
    if out_dtype == jnp.float32:
        kernel = _linear_kernel_f32_out
        scratch_shapes = []
        acc_bytes = 0
    else:
        kernel = _linear_kernel_acc
        scratch_shapes = [pltpu.VMEM((tm, tn), jnp.float32)]
        acc_bytes = tm * tn * 4

    # --- VMEM budget (clamped to the chip's real capacity; v7x = 64 MiB/TC) --
    vmem_est = (2 * (tm * tk + tk * tn) * w_item    # double-buffered x, W tiles
                + 2 * tn * 4                        # double-buffered bias row
                + 2 * tm * tn * out_item            # double-buffered output
                + acc_bytes)
    try:
        vmem_cap = int(pltpu.get_tpu_info().vmem_capacity_bytes)
    except Exception:  # conservative fallback (v7x per-TC capacity)
        vmem_cap = 64 << 20
    ceiling = (vmem_cap * 3) // 4
    vmem_limit = min(ceiling, max(32 << 20, int(1.5 * vmem_est) + (4 << 20)))

    cost = pl.CostEstimate(
        flops=2 * Bp * Cp * Ep,
        transcendentals=0,
        bytes_accessed=(gj * Bp * Ep * w_item       # x streamed once per class-tile column
                        + gi * Cp * Ep * w_item     # W streamed once per batch-tile row
                        + gi * gk * Cp * 4          # bias (tiny)
                        + Bp * Cp * out_item),      # output writeback
    )

    out_padded = pl.pallas_call(
        kernel,
        out_shape=jax.ShapeDtypeStruct((Bp, Cp), out_dtype),
        grid=grid,
        in_specs=[
            pl.BlockSpec((tm, tk), lambda i, j, k: (i, k)),   # x
            pl.BlockSpec((tk, tn), lambda i, j, k: (k, j)),   # weight (E, C)
            pl.BlockSpec((1, tn), lambda i, j, k: (0, j)),    # bias
        ],
        out_specs=pl.BlockSpec((tm, tn), lambda i, j, k: (i, j)),
        scratch_shapes=scratch_shapes,
        compiler_params=pltpu.CompilerParams(
            dimension_semantics=("parallel", "parallel", "arbitrary"),
            vmem_limit_bytes=vmem_limit,
        ),
        cost_estimate=cost,
    )(xp, params.w_ec, params.b_row)

    return out_padded[:B, :C]


if __name__ == "__main__":
    # Small shapes implied by the module: a batch of embeddings -> class logits.
    batch = 8
    embedding_size = 32
    num_classes = 16

    key = jax.random.PRNGKey(0)
    kx, kw, kb = jax.random.split(key, 3)

    # Deterministic params mimicking nn.Linear's uniform(-1/sqrt(E), 1/sqrt(E)).
    bound = 1.0 / (embedding_size ** 0.5)
    x = jax.random.normal(kx, (batch, embedding_size), dtype=jnp.float32)
    weight = jax.random.uniform(
        kw, (num_classes, embedding_size), minval=-bound, maxval=bound,
        dtype=jnp.float32)
    bias = jax.random.uniform(
        kb, (num_classes,), minval=-bound, maxval=bound, dtype=jnp.float32)

    ref = x @ weight.T + bias

    # Exact f32 path (nn.Linear semantics).  Params are prepared once at init.
    params_f32 = prepare_classifier_params(weight, bias)
    out_f32 = jax.block_until_ready(classifier_forward(params_f32, x))
    assert out_f32.shape == (batch, num_classes)
    assert jnp.allclose(out_f32, ref, atol=1e-5, rtol=1e-5)

    # bf16 weight/activation streaming (recommended default on v5e; halves W
    # bytes on all generations), f32 accumulation, f32 output.
    params_bf16 = prepare_classifier_params(weight, bias, compute_dtype=jnp.bfloat16)
    out_bf16 = jax.block_until_ready(classifier_forward(params_bf16, x))
    assert out_bf16.shape == (batch, num_classes)
    assert jnp.allclose(out_bf16, ref, atol=2e-2, rtol=2e-2)

    # bf16-output call exercises the f32-accumulator scratch variant.
    out_bf16_out = jax.block_until_ready(
        classifier_forward(params_bf16, x.astype(jnp.bfloat16)))
    assert out_bf16_out.shape == (batch, num_classes)
    assert out_bf16_out.dtype == jnp.bfloat16
    assert jnp.allclose(out_bf16_out.astype(jnp.float32), ref, atol=3e-2, rtol=3e-2)

    print("KERNEL_OK")
</pallas_src>

<mosaic_0001>
module attributes {stable_mosaic.version = 11 : i64} {
  func.func @_linear_kernel_f32_out(%arg0: i32, %arg1: i32, %arg2: i32, %arg3: memref<8x128xf32, #tpu.memory_space<vmem>>, %arg4: memref<128x128xf32, #tpu.memory_space<vmem>>, %arg5: memref<1x128xf32, #tpu.memory_space<vmem>>, %arg6: memref<8x128xf32, #tpu.memory_space<vmem>>) attributes {dimension_semantics = [#tpu.dimension_semantics<parallel>, #tpu.dimension_semantics<parallel>, #tpu.dimension_semantics<arbitrary>], iteration_bounds = array<i64: 1, 1, 1>, scalar_prefetch = 0 : i64, scratch_operands = 0 : i64, tpu.core_type = #tpu.core_type<tc>, window_params = [{transform_indices = @transform_0, window_bounds = array<i64: 8, 128>}, {transform_indices = @transform_1, window_bounds = array<i64: 128, 128>}, {transform_indices = @transform_2, window_bounds = array<i64: 1, 128>}, {transform_indices = @transform_3, window_bounds = array<i64: 8, 128>}]} {
    %c0_i32 = arith.constant 0 : i32
    %0 = arith.cmpi eq, %arg2, %c0_i32 : i32
    %1 = arith.extui %0 : i1 to i32
    %c0_i32_0 = arith.constant 0 : i32
    %2 = arith.cmpi ne, %1, %c0_i32_0 : i32
    scf.if %2 {
      %c0_8 = arith.constant 0 : index
      %c0_9 = arith.constant 0 : index
      %9 = vector.load %arg5[%c0_8, %c0_9] : memref<1x128xf32, #tpu.memory_space<vmem>>, vector<1x128xf32>
      %10 = vector.shape_cast %9 : vector<1x128xf32> to vector<1x128xf32>
      %11 = vector.broadcast %10 : vector<1x128xf32> to vector<8x128xf32>
      %c0_10 = arith.constant 0 : index
      %c0_11 = arith.constant 0 : index
      %12 = vector.load %arg6[%c0_10, %c0_11] : memref<8x128xf32, #tpu.memory_space<vmem>>, vector<8x128xf32>
      tpu.vector_store %arg6[%c0_10, %c0_11], %11 {strides = array<i32>} : memref<8x128xf32, #tpu.memory_space<vmem>>, vector<8x128xf32>,
    } else {
    }
    %c0 = arith.constant 0 : index
    %c0_1 = arith.constant 0 : index
    %3 = vector.load %arg6[%c0, %c0_1] : memref<8x128xf32, #tpu.memory_space<vmem>>, vector<8x128xf32>
    %c0_2 = arith.constant 0 : index
    %c0_3 = arith.constant 0 : index
    %4 = vector.load %arg3[%c0_2, %c0_3] : memref<8x128xf32, #tpu.memory_space<vmem>>, vector<8x128xf32>
    %c0_4 = arith.constant 0 : index
    %c0_5 = arith.constant 0 : index
    %5 = vector.load %arg4[%c0_4, %c0_5] : memref<128x128xf32, #tpu.memory_space<vmem>>, vector<128x128xf32>
    %cst = arith.constant dense<0.000000e+00> : vector<8x128xf32>
    %6 = tpu.matmul %4, %5, %cst {dimension_numbers = #tpu.dot_dimension_numbers<[1], [0], [0], [1], [0, 0, 1, 1], [], []>} : vector<8x128xf32>, vector<128x128xf32>, vector<8x128xf32> -> vector<8x128xf32>
    %7 = arith.addf %3, %6 : vector<8x128xf32>
    %c0_6 = arith.constant 0 : index
    %c0_7 = arith.constant 0 : index
    %8 = vector.load %arg6[%c0_6, %c0_7] : memref<8x128xf32, #tpu.memory_space<vmem>>, vector<8x128xf32>
    tpu.vector_store %arg6[%c0_6, %c0_7], %7 {strides = array<i32>} : memref<8x128xf32, #tpu.memory_space<vmem>>, vector<8x128xf32>,
    return
  }
  func.func @transform_0(%arg0: i32, %arg1: i32, %arg2: i32) -> (i32, i32) {
    %c0_i32 = arith.constant 0 : i32
    return %arg0, %arg2 : i32, i32
  }
  func.func @transform_1(%arg0: i32, %arg1: i32, %arg2: i32) -> (i32, i32) {
    %c0_i32 = arith.constant 0 : i32
    return %arg2, %arg1 : i32, i32
  }
  func.func @transform_2(%arg0: i32, %arg1: i32, %arg2: i32) -> (i32, i32) {
    %c0_i32 = arith.constant 0 : i32
    %c0_i32_0 = arith.constant 0 : i32
    return %c0_i32, %arg1 : i32, i32
  }
  func.func @transform_3(%arg0: i32, %arg1: i32, %arg2: i32) -> (i32, i32) {
    %c0_i32 = arith.constant 0 : i32
    return %arg0, %arg1 : i32, i32
  }
}

</mosaic_0001>

<llo_original>
// kernel: tpu_custom_call.1
$region0: #{tpu_custom_call.1}
  #allocation0 [shape = 'u32[]', space=smem, size = 0x4, offset = 0x4, fixed_abs, tag = 'smem constant byte address 0x4 - core index']
  #allocation1 [shape = 'u32[144,128]{1,0:T(1,128)}', space=vmem, size = 0x12000, scoped, tag = 'internal scratch']
  %s0 = inlined_call_operand.hbm [shape: f32[8,128], index: 0, kind: input, shape index: {}]
  %s1 = inlined_call_operand.hbm [shape: f32[128,128], index: 1, kind: input, shape index: {}]
  %s2 = inlined_call_operand.vmem [shape: f32[1,128], index: 2, kind: input, shape index: {}]
  %s3 = inlined_call_operand.hbm [shape: f32[8,128], index: 3, kind: output, shape index: {}]
  %s4 = sld [smem:[#allocation0]]
  $region34: #{tpu_custom_call.1} parent=0
    _
  %s6 = ssub.s32 1, %s4
  %s7 = scalar_select 0, %s6, %s4
  $region1: #{tpu_custom_call.1} parent=0
    #allocation2 [shape = 'u8[4096]{0}', space=vmem, size = 0x1000, scoped, tag = 'input window, operand 0, single buffered']
    #allocation3 [shape = 's32[1]{0}', space=sflag, size = 0x4, scoped, tag = 'scoped memory for tpu_custom_call.1']
    #allocation4 [shape = 's32[1]{0}', space=sflag, size = 0x4, scoped, tag = 'scoped memory for tpu_custom_call.1']
    #allocation5 [shape = 'u8[65536]{0}', space=vmem, size = 0x10000, scoped, tag = 'input window, operand 1, single buffered']
    #allocation6 [shape = 's32[1]{0}', space=sflag, size = 0x4, scoped, tag = 'scoped memory for tpu_custom_call.1']
    #allocation7 [shape = 'u8[4096]{0}', space=vmem, size = 0x1000, scoped, tag = 'output window, operand 0, single buffered']
    %8 = vsyncpa [#allocation3], 0
    %9 = vsyncpa [#allocation6], 0
    %10 = vsyncpa [#allocation4], 0
    // Predicated region
    $region2: #{tpu_custom_call.1} parent=1 // pred_check
      _
    $region3: #{tpu_custom_call.1} parent=1 // pred_check_branch
      %12 = sbr.rel (0) target = $region5
    $region4: #{tpu_custom_call.1} parent=1 // pred_region
      %s14 = ssub.s32 128, 128
      %15 = vsyncadd [#allocation3], %s14
      %s17 = sshll.u32 [#allocation2], 4
      %s18 = int_to_ptr.vmem [resolvable:$true] %s17
      %20 = dma.hbm_to_vmem [thread:$0]  %s0, 128, %s18, [#allocation3]
    $region5: #{tpu_custom_call.1} parent=1 // pred_fallthru
      _
    // Predicated region
    $region6: #{tpu_custom_call.1} parent=1 // pred_check
      _
    $region7: #{tpu_custom_call.1} parent=1 // pred_check_branch
      %22 = sbr.rel (0) target = $region9
    $region8: #{tpu_custom_call.1} parent=1 // pred_region
      %s24 = ssub.s32 2048, 2048
      %25 = vsyncadd [#allocation6], %s24
      %s26 = sshll.u32 [#allocation5], 4
      %s27 = int_to_ptr.vmem [resolvable:$true] %s26
      %32 = dma.hbm_to_vmem [thread:$0]  %s1, 2048, %s27, [#allocation6], 128, 128, 8
    $region9: #{tpu_custom_call.1} parent=1 // pred_fallthru
      _
    // Predicated region
    $region10: #{tpu_custom_call.1} parent=1 // pred_check
      _
    $region11: #{tpu_custom_call.1} parent=1 // pred_check_branch
      %34 = sbr.rel (0) target = $region13
    $region12: #{tpu_custom_call.1} parent=1 // pred_region
      _
    $region13: #{tpu_custom_call.1} parent=1 // pred_fallthru
      _
    // Predicated region
    $region14: #{tpu_custom_call.1} parent=1 // pred_check
      _
    $region15: #{tpu_custom_call.1} parent=1 // pred_check_branch
      %36 = sbr.rel (0) target = $region17
    $region16: #{tpu_custom_call.1} parent=1 // pred_region
      %37 = dma.done [#allocation3], 128
    $region17: #{tpu_custom_call.1} parent=1 // pred_fallthru
      _
    // Predicated region
    $region18: #{tpu_custom_call.1} parent=1 // pred_check
      _
    $region19: #{tpu_custom_call.1} parent=1 // pred_check_branch
      %39 = sbr.rel (0) target = $region21
    $region20: #{tpu_custom_call.1} parent=1 // pred_region
      %40 = dma.done [#allocation6], 2048
    $region21: #{tpu_custom_call.1} parent=1 // pred_fallthru
      _
    %p41 = scmp.eq.s32.totalorder 0, 0
    // Predicated region
    $region22: #{tpu_custom_call.1} parent=1 // pred_check
      %p42 = pneg %p41
    $region23: #{tpu_custom_call.1} parent=1 // pred_check_branch
      %44 = sbr.rel (%p42) target = $region25
    $region24: #{tpu_custom_call.1} parent=1 // pred_region
      %v45 = vld [vmem:[%s2] sm:$0x1]
      %v47 = vlaneseq
      %v48 = vshrl.u32 %v47, 7
      %v49 = vsub.s32 0, %v48
      %v50 = vrot.slane %v45, %v49
      %52 = vst [vmem:[#allocation7] sm:$0xff] %v50
    $region25: #{tpu_custom_call.1} parent=1 // pred_fallthru
      _
    %v53 = vld [vmem:[#allocation7] sm:$0xff]
    %v54 = vld [vmem:[#allocation2] sm:$0xff]
    %v55 = vld [vmem:[#allocation5] sm:$0xff]
    %v56 = vld [vmem:[#allocation5 + $0x8] sm:$0xff]
    %v57 = vld [vmem:[#allocation5 + $0x10] sm:$0xff]
    %v58 = vld [vmem:[#allocation5 + $0x18] sm:$0xff]
    %v59 = vld [vmem:[#allocation5 + $0x20] sm:$0xff]
    %v60 = vld [vmem:[#allocation5 + $0x28] sm:$0xff]
    %v61 = vld [vmem:[#allocation5 + $0x30] sm:$0xff]
    %v62 = vld [vmem:[#allocation5 + $0x38] sm:$0xff]
    %v63 = vld [vmem:[#allocation5 + $0x40] sm:$0xff]
    %v64 = vld [vmem:[#allocation5 + $0x48] sm:$0xff]
    %v65 = vld [vmem:[#allocation5 + $0x50] sm:$0xff]
    %v66 = vld [vmem:[#allocation5 + $0x58] sm:$0xff]
    %v67 = vld [vmem:[#allocation5 + $0x60] sm:$0xff]
    %v68 = vld [vmem:[#allocation5 + $0x68] sm:$0xff]
    %v69 = vld [vmem:[#allocation5 + $0x70] sm:$0xff]
    %v70 = vld [vmem:[#allocation5 + $0x78] sm:$0xff]
    %71 = vmatprep.subr.mxu0 0.0
    %72 = vmatpush1.msra.mxu0 %v55
    %73 = vmatprep.subr.mxu0 0.0
    %74 = vmatpush1.msra.mxu0 %v56
    %75 = vmatprep.subr.mxu0 0.0
    %76 = vmatpush1.msra.mxu0 %v57
    %77 = vmatprep.subr.mxu0 0.0
    %78 = vmatpush1.msra.mxu0 %v58
    %79 = vmatprep.subr.mxu0 0.0
    %80 = vmatpush1.msra.mxu0 %v59
    %81 = vmatprep.subr.mxu0 0.0
    %82 = vmatpush1.msra.mxu0 %v60
    %83 = vmatprep.subr.mxu0 0.0
    %84 = vmatpush1.msra.mxu0 %v61
    %85 = vmatprep.subr.mxu0 0.0
    %86 = vmatpush1.msra.mxu0 %v62
    %87 = vmatprep.subr.mxu0 0.0
    %88 = vmatpush1.msra.mxu0 %v63
    %89 = vmatprep.subr.mxu0 0.0
    %90 = vmatpush1.msra.mxu0 %v64
    %91 = vmatprep.subr.mxu0 0.0
    %92 = vmatpush1.msra.mxu0 %v65
    %93 = vmatprep.subr.mxu0 0.0
    %94 = vmatpush1.msra.mxu0 %v66
    %95 = vmatprep.subr.mxu0 0.0
    %96 = vmatpush1.msra.mxu0 %v67
    %97 = vmatprep.subr.mxu0 0.0
    %98 = vmatpush1.msra.mxu0 %v68
    %99 = vmatprep.subr.mxu0 0.0
    %100 = vmatpush1.msra.mxu0 %v69
    %101 = vmatprep.subr.mxu0 0.0
    %102 = vmatpush1.msra.mxu0 %v70
    %103 = vmatprep.subr.mxu0 0.0
    %104 = vmatpush1.msra.mxu0 0.0
    %105 = vmatprep.subr.mxu0 0.0
    %106 = vmatpush1.msra.mxu0 0.0
    %107 = vmatprep.subr.mxu0 0.0
    %108 = vmatpush1.msra.mxu0 0.0
    %109 = vmatprep.subr.mxu0 0.0
    %110 = vmatpush1.msra.mxu0 0.0
    %111 = vmatprep.subr.mxu0 0.0
    %112 = vmatpush1.msra.mxu0 0.0
    %113 = vmatprep.subr.mxu0 0.0
    %114 = vmatpush1.msra.mxu0 0.0
    %115 = vmatprep.subr.mxu0 0.0
    %116 = vmatpush1.msra.mxu0 0.0
    %117 = vmatprep.subr.mxu0 0.0
    %118 = vmatpush1.msra.mxu0 0.0
    %119 = vmatprep.subr.mxu0 0.0
    %120 = vmatpush1.msra.mxu0 0.0
    %121 = vmatprep.subr.mxu0 0.0
    %122 = vmatpush1.msra.mxu0 0.0
    %123 = vmatprep.subr.mxu0 0.0
    %124 = vmatpush1.msra.mxu0 0.0
    %125 = vmatprep.subr.mxu0 0.0
    %126 = vmatpush1.msra.mxu0 0.0
    %127 = vmatprep.subr.mxu0 0.0
    %128 = vmatpush1.msra.mxu0 0.0
    %129 = vmatprep.subr.mxu0 0.0
    %130 = vmatpush1.msra.mxu0 0.0
    %131 = vmatprep.subr.mxu0 0.0
    %132 = vmatpush1.msra.mxu0 0.0
    %133 = vmatprep.subr.mxu0 0.0
    %134 = vmatpush1.msra.mxu0 0.0
    %135 = vmatprep.mubr.f32.mxu0 0.0
    %136 = vmatmul.mubr.f32.gmra.mrb[0].mxu0 %v54
    %v137 = vpop.f32.mrb[0].mxu0
    %v138 = vadd.f32 0.0, %v137
    %v139 = vpop.f32.mrb[0].mxu0
    %140 = vdwg.mxu0
    %v141 = vadd.f32 %v53, %v138
    %142 = vst [vmem:[#allocation7] sm:$0xff] %v141
    // Predicated region
    $region26: #{tpu_custom_call.1} parent=1 // pred_check
      _
    $region27: #{tpu_custom_call.1} parent=1 // pred_check_branch
      %144 = sbr.rel (0) target = $region29
    $region28: #{tpu_custom_call.1} parent=1 // pred_region
      %s146 = ssub.s32 128, 128
      %147 = vsyncadd [#allocation4], %s146
      %s149 = sshll.u32 [#allocation7], 4
      %s150 = int_to_ptr.vmem [resolvable:$true] %s149
      %152 = dma.vmem_to_hbm [thread:$0]  %s150, 128, %s3, [#allocation4]
    $region29: #{tpu_custom_call.1} parent=1 // pred_fallthru
      _
    // Predicated region
    $region30: #{tpu_custom_call.1} parent=1 // pred_check
      _
    $region31: #{tpu_custom_call.1} parent=1 // pred_check_branch
      %154 = sbr.rel (0) target = $region33
    $region32: #{tpu_custom_call.1} parent=1 // pred_region
      %155 = dma.done [#allocation4], 128
    $region33: #{tpu_custom_call.1} parent=1 // pred_fallthru
      _
    %156 = vsyncpa [#allocation3], 1
    %157 = vsyncpa [#allocation6], 1
    %158 = vsyncpa [#allocation4], 1

</llo_original>
